<compile_context>
chip_gen: v5e
topology: v5e:2x2
jax: 0.10.0
libtpu: 0.0.40
codegen_flags: <defaults>
</compile_context>

<pallas_src>
import functools

import jax
import jax.numpy as jnp
from jax.experimental import pallas as pl
from jax.experimental.pallas import tpu as pltpu

K = 9       # conv kernel size
PAD = 4     # conv padding ("same")
EPS = 1e-5  # BatchNorm eps


def _block_kernel(c_in, c_out, N, L, mm_dtype,
                  x_ref,                     # (c_in, N*L)        f32
                  w1_ref, g1_ref, be1_ref,   # (c_out, K*c_in) mm_dtype, (c_out,1) f32 x2
                  w2_ref, g2_ref, be2_ref,   # (c_out, K*c_out) mm_dtype, (c_out,1) f32 x2
                  ws_ref, bs_ref,            # (c_out, c_in) mm_dtype, (c_out,1) f32
                  out_ref,                   # (c_out, N*L)       f32
                  im_ref):                   # (K*max(c_in,c_out), N*L) f32 scratch
    NL = N * L
    inv_cnt = 1.0 / float(NL)

    def im2col(h, C):
        """Write K shifted+masked copies of h (C, NL) into im_ref[:K*C]."""
        pos = jax.lax.broadcasted_iota(jnp.int32, (C, NL), 1) % L
        for t in range(K):
            s = t - PAD                       # tap shift in [-PAD, PAD]
            if s == 0:
                im_ref[t * C:(t + 1) * C, :] = h
            else:
                shifted = pltpu.roll(h, shift=(-s) % NL, axis=1)
                valid = jnp.logical_and(pos + s >= 0, pos + s < L)
                im_ref[t * C:(t + 1) * C, :] = jnp.where(valid, shifted, 0.0)

    def bn_scale_bias(h, g, be):
        """Fold training-mode BatchNorm into per-channel (scale, bias)."""
        ssum = jnp.sum(h, axis=1, keepdims=True)       # one sweep: sum
        ssq = jnp.sum(h * h, axis=1, keepdims=True)    #            sum of squares
        m = ssum * inv_cnt
        v = ssq * inv_cnt - m * m                      # biased variance
        scale = g * jax.lax.rsqrt(v + EPS)             # rsqrt -> EUP slot
        bias = be - m * scale
        return scale, bias

    x = x_ref[...]

    # ---- conv1: single MXU matmul, contraction depth K*c_in ---------------
    # (conv bias dropped: cancelled exactly by the BN mean subtraction)
    im2col(x, c_in)
    h1 = jnp.dot(w1_ref[...], im_ref[0:K * c_in, :].astype(mm_dtype),
                 preferred_element_type=jnp.float32)
    s1, b1 = bn_scale_bias(h1, g1_ref[...], be1_ref[...])
    h1 = jnp.maximum(h1 * s1 + b1, 0.0)                # BN1 + ReLU epilogue

    # ---- conv2: single MXU matmul, contraction depth K*c_out (reuses im_ref)
    im2col(h1, c_out)
    h2 = jnp.dot(w2_ref[...], im_ref[0:K * c_out, :].astype(mm_dtype),
                 preferred_element_type=jnp.float32)
    s2, b2 = bn_scale_bias(h2, g2_ref[...], be2_ref[...])

    # ---- 1x1 skip conv fused with BN2 + ReLU epilogue and residual add -----
    skip = jnp.dot(ws_ref[...], x.astype(mm_dtype),
                   preferred_element_type=jnp.float32)
    out_ref[...] = jnp.maximum(h2 * s2 + b2, 0.0) + skip + bs_ref[...]


def block_forward(x, params, *, mm_dtype=jnp.bfloat16):
    """x: (N, c_in, L) float32 -> (N, c_out, L) float32."""
    N, c_in, L = x.shape
    c_out = params["w1"].shape[0]
    NL = N * L
    cmax = max(c_in, c_out)

    # Host-side layout plumbing (free): batch folded into the lane axis, conv
    # weights flattened to the im2col layout (c_out, K*C), matmul weights cast
    # to mm_dtype. Conv biases b1/b2 are intentionally NOT passed (see kernel).
    x2d = x.transpose(1, 0, 2).reshape(c_in, NL)
    w1f = params["w1"].transpose(0, 2, 1).reshape(c_out, K * c_in).astype(mm_dtype)
    w2f = params["w2"].transpose(0, 2, 1).reshape(c_out, K * c_out).astype(mm_dtype)
    wsf = params["ws"].astype(mm_dtype)

    kernel = functools.partial(_block_kernel, c_in, c_out, N, L, mm_dtype)
    vmem = pl.BlockSpec(memory_space=pltpu.MemorySpace.VMEM)
    inputs = (x2d,
              w1f, params["g1"], params["be1"],
              w2f, params["g2"], params["be2"],
              wsf, params["bs"])

    out2d = pl.pallas_call(
        kernel,
        out_shape=jax.ShapeDtypeStruct((c_out, NL), jnp.float32),
        in_specs=[vmem] * len(inputs),
        out_specs=vmem,
        scratch_shapes=[
            # single im2col scratch, shared by conv1 and conv2
            pltpu.VMEM((K * cmax, NL), jnp.float32),
        ],
        compiler_params=pltpu.CompilerParams(vmem_limit_bytes=32 * 1024 * 1024),
    )(*inputs)

    return out2d.reshape(c_out, N, L).transpose(1, 0, 2)


def init_params(key, c_in, c_out):
    """Deterministic synthetic parameters (PyTorch-style uniform conv init)."""
    ks = jax.random.split(key, 8)
    lim1 = 1.0 / (c_in * K) ** 0.5
    lim2 = 1.0 / (c_out * K) ** 0.5
    lims = 1.0 / c_in ** 0.5
    u = jax.random.uniform
    return {
        "w1": u(ks[0], (c_out, c_in, K), jnp.float32, -lim1, lim1),
        "b1": u(ks[1], (c_out, 1), jnp.float32, -lim1, lim1),
        "g1": 1.0 + 0.1 * u(ks[2], (c_out, 1), jnp.float32, -1.0, 1.0),
        "be1": 0.1 * u(ks[3], (c_out, 1), jnp.float32, -1.0, 1.0),
        "w2": u(ks[4], (c_out, c_out, K), jnp.float32, -lim2, lim2),
        "b2": u(ks[5], (c_out, 1), jnp.float32, -lim2, lim2),
        "g2": 1.0 + 0.1 * u(ks[6], (c_out, 1), jnp.float32, -1.0, 1.0),
        "be2": 0.1 * u(ks[7], (c_out, 1), jnp.float32, -1.0, 1.0),
        "ws": u(ks[0], (c_out, c_in), jnp.float32, -lims, lims),
        "bs": u(ks[1], (c_out, 1), jnp.float32, -lims, lims),
    }


def reference(x, p):
    """Pure-JAX reference matching the PyTorch forward (training-mode BN)."""
    def conv1d(h, w, b):
        return jax.lax.conv_general_dilated(
            h, w, window_strides=(1,), padding=[(PAD, PAD)],
            dimension_numbers=("NCH", "OIH", "NCH")) + b[None, :, :]

    def bn(h, g, be):
        m = h.mean(axis=(0, 2), keepdims=True)
        v = ((h - m) ** 2).mean(axis=(0, 2), keepdims=True)
        return g[None] * (h - m) * jax.lax.rsqrt(v + EPS) + be[None]

    h = jnp.maximum(bn(conv1d(x, p["w1"], p["b1"]), p["g1"], p["be1"]), 0.0)
    h = jnp.maximum(bn(conv1d(h, p["w2"], p["b2"]), p["g2"], p["be2"]), 0.0)
    skip = jnp.einsum("oi,nil->nol", p["ws"], x) + p["bs"][None]
    return h + skip


if __name__ == "__main__":
    N, C_IN, C_OUT, L = 2, 4, 8, 128
    key = jax.random.PRNGKey(0)
    kx, kp = jax.random.split(key)
    x = jax.random.normal(kx, (N, C_IN, L), jnp.float32)
    params = init_params(kp, C_IN, C_OUT)

    ref = jax.block_until_ready(reference(x, params))

    # Exact-precision variant (f32 MXU operands): tight structural check of the
    # im2col taps / masks, folded BN, dropped conv biases and fused skip.
    out_f32 = jax.block_until_ready(
        block_forward(x, params, mm_dtype=jnp.float32))
    assert out_f32.shape == (N, C_OUT, L)
    assert jnp.allclose(out_f32, ref, atol=1e-4, rtol=1e-4), (
        float(jnp.max(jnp.abs(out_f32 - ref))))

    # Performance variant (bf16 MXU operands, f32 accumulation): looser
    # tolerance accounts for bf16 operand quantization (~2^-9 relative).
    out_bf16 = jax.block_until_ready(block_forward(x, params))
    assert out_bf16.shape == (N, C_OUT, L)
    assert jnp.allclose(out_bf16, ref, atol=5e-2, rtol=5e-2), (
        float(jnp.max(jnp.abs(out_bf16 - ref))))

    print("KERNEL_OK")
</pallas_src>

<mosaic_0001>
module attributes {stable_mosaic.version = 11 : i64} {
  func.func @_block_kernel(%arg0: memref<4x256xf32, #tpu.memory_space<vmem>>, %arg1: memref<8x36xf32, #tpu.memory_space<vmem>>, %arg2: memref<8x1xf32, #tpu.memory_space<vmem>>, %arg3: memref<8x1xf32, #tpu.memory_space<vmem>>, %arg4: memref<8x72xf32, #tpu.memory_space<vmem>>, %arg5: memref<8x1xf32, #tpu.memory_space<vmem>>, %arg6: memref<8x1xf32, #tpu.memory_space<vmem>>, %arg7: memref<8x4xf32, #tpu.memory_space<vmem>>, %arg8: memref<8x1xf32, #tpu.memory_space<vmem>>, %arg9: memref<8x256xf32, #tpu.memory_space<vmem>>, %arg10: memref<72x256xf32, #tpu.memory_space<vmem>>) attributes {dimension_semantics = [], scalar_prefetch = 0 : i64, scratch_operands = 1 : i64, tpu.core_type = #tpu.core_type<tc>} {
    %c0 = arith.constant 0 : index
    %c0_0 = arith.constant 0 : index
    %0 = vector.load %arg0[%c0, %c0_0] : memref<4x256xf32, #tpu.memory_space<vmem>>, vector<4x256xf32>
    %1 = tpu.iota {dimensions = array<i32: 1>} : vector<4x256xi32>
    %c128_i32 = arith.constant 128 : i32
    %c0_i32 = arith.constant 0 : i32
    %2 = arith.cmpi eq, %c128_i32, %c0_i32 : i32
    %c1_i32 = arith.constant 1 : i32
    %3 = arith.select %2, %c1_i32, %c128_i32 : i32
    %4 = vector.broadcast %3 : i32 to vector<4x256xi32>
    %5 = arith.remsi %1, %4 : vector<4x256xi32>
    %c0_i32_1 = arith.constant 0 : i32
    %6 = vector.broadcast %c0_i32_1 : i32 to vector<4x256xi32>
    %7 = arith.cmpi ne, %5, %6 : vector<4x256xi32>
    %c0_i32_2 = arith.constant 0 : i32
    %8 = vector.broadcast %c0_i32_2 : i32 to vector<4x256xi32>
    %9 = arith.cmpi slt, %5, %8 : vector<4x256xi32>
    %c0_i32_3 = arith.constant 0 : i32
    %10 = arith.cmpi slt, %3, %c0_i32_3 : i32
    %11 = vector.broadcast %10 : i1 to vector<4x256xi1>
    %12 = vector.broadcast %11 : vector<4x256xi1> to vector<4x256xi1>
    %13 = arith.xori %9, %12 : vector<4x256xi1>
    %14 = arith.andi %13, %7 : vector<4x256xi1>
    %15 = vector.broadcast %3 : i32 to vector<4x256xi32>
    %16 = arith.addi %5, %15 : vector<4x256xi32>
    %17 = arith.select %14, %16, %5 : vector<4x256xi1>, vector<4x256xi32>
    %c4_i32 = arith.constant 4 : i32
    %18 = tpu.dynamic_rotate %0 by %c4_i32 dim 1 : vector<4x256xf32>, i32 -> vector<4x256xf32>
    %c-4_i32 = arith.constant -4 : i32
    %19 = vector.broadcast %c-4_i32 : i32 to vector<4x256xi32>
    %20 = arith.addi %17, %19 : vector<4x256xi32>
    %c0_i32_4 = arith.constant 0 : i32
    %21 = vector.broadcast %c0_i32_4 : i32 to vector<4x256xi32>
    %22 = arith.cmpi sge, %20, %21 : vector<4x256xi32>
    %c-4_i32_5 = arith.constant -4 : i32
    %23 = vector.broadcast %c-4_i32_5 : i32 to vector<4x256xi32>
    %24 = arith.addi %17, %23 : vector<4x256xi32>
    %c128_i32_6 = arith.constant 128 : i32
    %25 = vector.broadcast %c128_i32_6 : i32 to vector<4x256xi32>
    %26 = arith.cmpi slt, %24, %25 : vector<4x256xi32>
    %27 = arith.andi %22, %26 : vector<4x256xi1>
    %cst = arith.constant 0.000000e+00 : f32
    %28 = vector.broadcast %cst : f32 to vector<4x256xf32>
    %29 = arith.select %27, %18, %28 : vector<4x256xi1>, vector<4x256xf32>
    %c0_7 = arith.constant 0 : index
    %c0_8 = arith.constant 0 : index
    %30 = vector.load %arg10[%c0_7, %c0_8] : memref<72x256xf32, #tpu.memory_space<vmem>>, vector<4x256xf32>
    tpu.vector_store %arg10[%c0_7, %c0_8], %29 {strides = array<i32>} : memref<72x256xf32, #tpu.memory_space<vmem>>, vector<4x256xf32>,
    %c3_i32 = arith.constant 3 : i32
    %31 = tpu.dynamic_rotate %0 by %c3_i32 dim 1 : vector<4x256xf32>, i32 -> vector<4x256xf32>
    %c-3_i32 = arith.constant -3 : i32
    %32 = vector.broadcast %c-3_i32 : i32 to vector<4x256xi32>
    %33 = arith.addi %17, %32 : vector<4x256xi32>
    %c0_i32_9 = arith.constant 0 : i32
    %34 = vector.broadcast %c0_i32_9 : i32 to vector<4x256xi32>
    %35 = arith.cmpi sge, %33, %34 : vector<4x256xi32>
    %c-3_i32_10 = arith.constant -3 : i32
    %36 = vector.broadcast %c-3_i32_10 : i32 to vector<4x256xi32>
    %37 = arith.addi %17, %36 : vector<4x256xi32>
    %c128_i32_11 = arith.constant 128 : i32
    %38 = vector.broadcast %c128_i32_11 : i32 to vector<4x256xi32>
    %39 = arith.cmpi slt, %37, %38 : vector<4x256xi32>
    %40 = arith.andi %35, %39 : vector<4x256xi1>
    %cst_12 = arith.constant 0.000000e+00 : f32
    %41 = vector.broadcast %cst_12 : f32 to vector<4x256xf32>
    %42 = arith.select %40, %31, %41 : vector<4x256xi1>, vector<4x256xf32>
    %c4 = arith.constant 4 : index
    %c0_13 = arith.constant 0 : index
    %43 = vector.load %arg10[%c4, %c0_13] : memref<72x256xf32, #tpu.memory_space<vmem>>, vector<4x256xf32>
    tpu.vector_store %arg10[%c4, %c0_13], %42 {strides = array<i32>} : memref<72x256xf32, #tpu.memory_space<vmem>>, vector<4x256xf32>,
    %c2_i32 = arith.constant 2 : i32
    %44 = tpu.dynamic_rotate %0 by %c2_i32 dim 1 : vector<4x256xf32>, i32 -> vector<4x256xf32>
    %c-2_i32 = arith.constant -2 : i32
    %45 = vector.broadcast %c-2_i32 : i32 to vector<4x256xi32>
    %46 = arith.addi %17, %45 : vector<4x256xi32>
    %c0_i32_14 = arith.constant 0 : i32
    %47 = vector.broadcast %c0_i32_14 : i32 to vector<4x256xi32>
    %48 = arith.cmpi sge, %46, %47 : vector<4x256xi32>
    %c-2_i32_15 = arith.constant -2 : i32
    %49 = vector.broadcast %c-2_i32_15 : i32 to vector<4x256xi32>
    %50 = arith.addi %17, %49 : vector<4x256xi32>
    %c128_i32_16 = arith.constant 128 : i32
    %51 = vector.broadcast %c128_i32_16 : i32 to vector<4x256xi32>
    %52 = arith.cmpi slt, %50, %51 : vector<4x256xi32>
    %53 = arith.andi %48, %52 : vector<4x256xi1>
    %cst_17 = arith.constant 0.000000e+00 : f32
    %54 = vector.broadcast %cst_17 : f32 to vector<4x256xf32>
    %55 = arith.select %53, %44, %54 : vector<4x256xi1>, vector<4x256xf32>
    %c8 = arith.constant 8 : index
    %c0_18 = arith.constant 0 : index
    %56 = vector.load %arg10[%c8, %c0_18] : memref<72x256xf32, #tpu.memory_space<vmem>>, vector<4x256xf32>
    tpu.vector_store %arg10[%c8, %c0_18], %55 {strides = array<i32>} : memref<72x256xf32, #tpu.memory_space<vmem>>, vector<4x256xf32>,
    %c1_i32_19 = arith.constant 1 : i32
    %57 = tpu.dynamic_rotate %0 by %c1_i32_19 dim 1 : vector<4x256xf32>, i32 -> vector<4x256xf32>
    %c-1_i32 = arith.constant -1 : i32
    %58 = vector.broadcast %c-1_i32 : i32 to vector<4x256xi32>
    %59 = arith.addi %17, %58 : vector<4x256xi32>
    %c0_i32_20 = arith.constant 0 : i32
    %60 = vector.broadcast %c0_i32_20 : i32 to vector<4x256xi32>
    %61 = arith.cmpi sge, %59, %60 : vector<4x256xi32>
    %c-1_i32_21 = arith.constant -1 : i32
    %62 = vector.broadcast %c-1_i32_21 : i32 to vector<4x256xi32>
    %63 = arith.addi %17, %62 : vector<4x256xi32>
    %c128_i32_22 = arith.constant 128 : i32
    %64 = vector.broadcast %c128_i32_22 : i32 to vector<4x256xi32>
    %65 = arith.cmpi slt, %63, %64 : vector<4x256xi32>
    %66 = arith.andi %61, %65 : vector<4x256xi1>
    %cst_23 = arith.constant 0.000000e+00 : f32
    %67 = vector.broadcast %cst_23 : f32 to vector<4x256xf32>
    %68 = arith.select %66, %57, %67 : vector<4x256xi1>, vector<4x256xf32>
    %c12 = arith.constant 12 : index
    %c0_24 = arith.constant 0 : index
    %69 = vector.load %arg10[%c12, %c0_24] : memref<72x256xf32, #tpu.memory_space<vmem>>, vector<4x256xf32>
    tpu.vector_store %arg10[%c12, %c0_24], %68 {strides = array<i32>} : memref<72x256xf32, #tpu.memory_space<vmem>>, vector<4x256xf32>,
    %c16 = arith.constant 16 : index
    %c0_25 = arith.constant 0 : index
    %70 = vector.load %arg10[%c16, %c0_25] : memref<72x256xf32, #tpu.memory_space<vmem>>, vector<4x256xf32>
    tpu.vector_store %arg10[%c16, %c0_25], %0 {strides = array<i32>} : memref<72x256xf32, #tpu.memory_space<vmem>>, vector<4x256xf32>,
    %c255_i32 = arith.constant 255 : i32
    %71 = tpu.dynamic_rotate %0 by %c255_i32 dim 1 : vector<4x256xf32>, i32 -> vector<4x256xf32>
    %c1_i32_26 = arith.constant 1 : i32
    %72 = vector.broadcast %c1_i32_26 : i32 to vector<4x256xi32>
    %73 = arith.addi %17, %72 : vector<4x256xi32>
    %c0_i32_27 = arith.constant 0 : i32
    %74 = vector.broadcast %c0_i32_27 : i32 to vector<4x256xi32>
    %75 = arith.cmpi sge, %73, %74 : vector<4x256xi32>
    %c1_i32_28 = arith.constant 1 : i32
    %76 = vector.broadcast %c1_i32_28 : i32 to vector<4x256xi32>
    %77 = arith.addi %17, %76 : vector<4x256xi32>
    %c128_i32_29 = arith.constant 128 : i32
    %78 = vector.broadcast %c128_i32_29 : i32 to vector<4x256xi32>
    %79 = arith.cmpi slt, %77, %78 : vector<4x256xi32>
    %80 = arith.andi %75, %79 : vector<4x256xi1>
    %cst_30 = arith.constant 0.000000e+00 : f32
    %81 = vector.broadcast %cst_30 : f32 to vector<4x256xf32>
    %82 = arith.select %80, %71, %81 : vector<4x256xi1>, vector<4x256xf32>
    %c20 = arith.constant 20 : index
    %c0_31 = arith.constant 0 : index
    %83 = vector.load %arg10[%c20, %c0_31] : memref<72x256xf32, #tpu.memory_space<vmem>>, vector<4x256xf32>
    tpu.vector_store %arg10[%c20, %c0_31], %82 {strides = array<i32>} : memref<72x256xf32, #tpu.memory_space<vmem>>, vector<4x256xf32>,
    %c254_i32 = arith.constant 254 : i32
    %84 = tpu.dynamic_rotate %0 by %c254_i32 dim 1 : vector<4x256xf32>, i32 -> vector<4x256xf32>
    %c2_i32_32 = arith.constant 2 : i32
    %85 = vector.broadcast %c2_i32_32 : i32 to vector<4x256xi32>
    %86 = arith.addi %17, %85 : vector<4x256xi32>
    %c0_i32_33 = arith.constant 0 : i32
    %87 = vector.broadcast %c0_i32_33 : i32 to vector<4x256xi32>
    %88 = arith.cmpi sge, %86, %87 : vector<4x256xi32>
    %c2_i32_34 = arith.constant 2 : i32
    %89 = vector.broadcast %c2_i32_34 : i32 to vector<4x256xi32>
    %90 = arith.addi %17, %89 : vector<4x256xi32>
    %c128_i32_35 = arith.constant 128 : i32
    %91 = vector.broadcast %c128_i32_35 : i32 to vector<4x256xi32>
    %92 = arith.cmpi slt, %90, %91 : vector<4x256xi32>
    %93 = arith.andi %88, %92 : vector<4x256xi1>
    %cst_36 = arith.constant 0.000000e+00 : f32
    %94 = vector.broadcast %cst_36 : f32 to vector<4x256xf32>
    %95 = arith.select %93, %84, %94 : vector<4x256xi1>, vector<4x256xf32>
    %c24 = arith.constant 24 : index
    %c0_37 = arith.constant 0 : index
    %96 = vector.load %arg10[%c24, %c0_37] : memref<72x256xf32, #tpu.memory_space<vmem>>, vector<4x256xf32>
    tpu.vector_store %arg10[%c24, %c0_37], %95 {strides = array<i32>} : memref<72x256xf32, #tpu.memory_space<vmem>>, vector<4x256xf32>,
    %c253_i32 = arith.constant 253 : i32
    %97 = tpu.dynamic_rotate %0 by %c253_i32 dim 1 : vector<4x256xf32>, i32 -> vector<4x256xf32>
    %c3_i32_38 = arith.constant 3 : i32
    %98 = vector.broadcast %c3_i32_38 : i32 to vector<4x256xi32>
    %99 = arith.addi %17, %98 : vector<4x256xi32>
    %c0_i32_39 = arith.constant 0 : i32
    %100 = vector.broadcast %c0_i32_39 : i32 to vector<4x256xi32>
    %101 = arith.cmpi sge, %99, %100 : vector<4x256xi32>
    %c3_i32_40 = arith.constant 3 : i32
    %102 = vector.broadcast %c3_i32_40 : i32 to vector<4x256xi32>
    %103 = arith.addi %17, %102 : vector<4x256xi32>
    %c128_i32_41 = arith.constant 128 : i32
    %104 = vector.broadcast %c128_i32_41 : i32 to vector<4x256xi32>
    %105 = arith.cmpi slt, %103, %104 : vector<4x256xi32>
    %106 = arith.andi %101, %105 : vector<4x256xi1>
    %cst_42 = arith.constant 0.000000e+00 : f32
    %107 = vector.broadcast %cst_42 : f32 to vector<4x256xf32>
    %108 = arith.select %106, %97, %107 : vector<4x256xi1>, vector<4x256xf32>
    %c28 = arith.constant 28 : index
    %c0_43 = arith.constant 0 : index
    %109 = vector.load %arg10[%c28, %c0_43] : memref<72x256xf32, #tpu.memory_space<vmem>>, vector<4x256xf32>
    tpu.vector_store %arg10[%c28, %c0_43], %108 {strides = array<i32>} : memref<72x256xf32, #tpu.memory_space<vmem>>, vector<4x256xf32>,
    %c252_i32 = arith.constant 252 : i32
    %110 = tpu.dynamic_rotate %0 by %c252_i32 dim 1 : vector<4x256xf32>, i32 -> vector<4x256xf32>
    %c4_i32_44 = arith.constant 4 : i32
    %111 = vector.broadcast %c4_i32_44 : i32 to vector<4x256xi32>
    %112 = arith.addi %17, %111 : vector<4x256xi32>
    %c0_i32_45 = arith.constant 0 : i32
    %113 = vector.broadcast %c0_i32_45 : i32 to vector<4x256xi32>
    %114 = arith.cmpi sge, %112, %113 : vector<4x256xi32>
    %c4_i32_46 = arith.constant 4 : i32
    %115 = vector.broadcast %c4_i32_46 : i32 to vector<4x256xi32>
    %116 = arith.addi %17, %115 : vector<4x256xi32>
    %c128_i32_47 = arith.constant 128 : i32
    %117 = vector.broadcast %c128_i32_47 : i32 to vector<4x256xi32>
    %118 = arith.cmpi slt, %116, %117 : vector<4x256xi32>
    %119 = arith.andi %114, %118 : vector<4x256xi1>
    %cst_48 = arith.constant 0.000000e+00 : f32
    %120 = vector.broadcast %cst_48 : f32 to vector<4x256xf32>
    %121 = arith.select %119, %110, %120 : vector<4x256xi1>, vector<4x256xf32>
    %c32 = arith.constant 32 : index
    %c0_49 = arith.constant 0 : index
    %122 = vector.load %arg10[%c32, %c0_49] : memref<72x256xf32, #tpu.memory_space<vmem>>, vector<4x256xf32>
    tpu.vector_store %arg10[%c32, %c0_49], %121 {strides = array<i32>} : memref<72x256xf32, #tpu.memory_space<vmem>>, vector<4x256xf32>,
    %c0_50 = arith.constant 0 : index
    %c0_51 = arith.constant 0 : index
    %123 = vector.load %arg1[%c0_50, %c0_51] : memref<8x36xf32, #tpu.memory_space<vmem>>, vector<8x36xf32>
    %c0_52 = arith.constant 0 : index
    %c0_53 = arith.constant 0 : index
    %124 = vector.load %arg10[%c0_52, %c0_53] : memref<72x256xf32, #tpu.memory_space<vmem>>, vector<36x256xf32>
    %cst_54 = arith.constant dense<0.000000e+00> : vector<8x256xf32>
    %125 = tpu.matmul %123, %124, %cst_54 {dimension_numbers = #tpu.dot_dimension_numbers<[1], [0], [0], [1], [0, 0, 1, 1], [], []>} : vector<8x36xf32>, vector<36x256xf32>, vector<8x256xf32> -> vector<8x256xf32>
    %c0_55 = arith.constant 0 : index
    %c0_56 = arith.constant 0 : index
    %126 = vector.load %arg2[%c0_55, %c0_56] : memref<8x1xf32, #tpu.memory_space<vmem>>, vector<8x1xf32>
    %c0_57 = arith.constant 0 : index
    %c0_58 = arith.constant 0 : index
    %127 = vector.load %arg3[%c0_57, %c0_58] : memref<8x1xf32, #tpu.memory_space<vmem>>, vector<8x1xf32>
    %cst_59 = arith.constant dense<0.000000e+00> : vector<8xf32>
    %128 = vector.multi_reduction <add>, %125, %cst_59 [1] : vector<8x256xf32> to vector<8xf32>
    %129 = vector.shape_cast %128 : vector<8xf32> to vector<8x1xf32>
    %130 = arith.mulf %125, %125 : vector<8x256xf32>
    %cst_60 = arith.constant dense<0.000000e+00> : vector<8xf32>
    %131 = vector.multi_reduction <add>, %130, %cst_60 [1] : vector<8x256xf32> to vector<8xf32>
    %132 = vector.shape_cast %131 : vector<8xf32> to vector<8x1xf32>
    %cst_61 = arith.constant 3.906250e-03 : f32
    %133 = vector.broadcast %cst_61 : f32 to vector<8x1xf32>
    %134 = arith.mulf %129, %133 : vector<8x1xf32>
    %cst_62 = arith.constant 3.906250e-03 : f32
    %135 = vector.broadcast %cst_62 : f32 to vector<8x1xf32>
    %136 = arith.mulf %132, %135 : vector<8x1xf32>
    %137 = arith.mulf %134, %134 : vector<8x1xf32>
    %138 = arith.subf %136, %137 : vector<8x1xf32>
    %cst_63 = arith.constant 9.99999974E-6 : f32
    %139 = vector.broadcast %cst_63 : f32 to vector<8x1xf32>
    %140 = arith.addf %138, %139 : vector<8x1xf32>
    %141 = math.rsqrt %140 : vector<8x1xf32>
    %142 = arith.mulf %126, %141 : vector<8x1xf32>
    %143 = arith.mulf %134, %142 : vector<8x1xf32>
    %144 = arith.subf %127, %143 : vector<8x1xf32>
    %145 = vector.broadcast %142 : vector<8x1xf32> to vector<8x256xf32>
    %146 = arith.mulf %125, %145 : vector<8x256xf32>
    %147 = vector.broadcast %144 : vector<8x1xf32> to vector<8x256xf32>
    %148 = arith.addf %146, %147 : vector<8x256xf32>
    %cst_64 = arith.constant 0.000000e+00 : f32
    %149 = vector.broadcast %cst_64 : f32 to vector<8x256xf32>
    %150 = arith.maximumf %148, %149 : vector<8x256xf32>
    %151 = tpu.iota {dimensions = array<i32: 1>} : vector<8x256xi32>
    %c128_i32_65 = arith.constant 128 : i32
    %c0_i32_66 = arith.constant 0 : i32
    %152 = arith.cmpi eq, %c128_i32_65, %c0_i32_66 : i32
    %c1_i32_67 = arith.constant 1 : i32
    %153 = arith.select %152, %c1_i32_67, %c128_i32_65 : i32
    %154 = vector.broadcast %153 : i32 to vector<8x256xi32>
    %155 = arith.remsi %151, %154 : vector<8x256xi32>
    %c0_i32_68 = arith.constant 0 : i32
    %156 = vector.broadcast %c0_i32_68 : i32 to vector<8x256xi32>
    %157 = arith.cmpi ne, %155, %156 : vector<8x256xi32>
    %c0_i32_69 = arith.constant 0 : i32
    %158 = vector.broadcast %c0_i32_69 : i32 to vector<8x256xi32>
    %159 = arith.cmpi slt, %155, %158 : vector<8x256xi32>
    %c0_i32_70 = arith.constant 0 : i32
    %160 = arith.cmpi slt, %153, %c0_i32_70 : i32
    %161 = vector.broadcast %160 : i1 to vector<8x256xi1>
    %162 = vector.broadcast %161 : vector<8x256xi1> to vector<8x256xi1>
    %163 = arith.xori %159, %162 : vector<8x256xi1>
    %164 = arith.andi %163, %157 : vector<8x256xi1>
    %165 = vector.broadcast %153 : i32 to vector<8x256xi32>
    %166 = arith.addi %155, %165 : vector<8x256xi32>
    %167 = arith.select %164, %166, %155 : vector<8x256xi1>, vector<8x256xi32>
    %c4_i32_71 = arith.constant 4 : i32
    %168 = tpu.dynamic_rotate %150 by %c4_i32_71 dim 1 : vector<8x256xf32>, i32 -> vector<8x256xf32>
    %c-4_i32_72 = arith.constant -4 : i32
    %169 = vector.broadcast %c-4_i32_72 : i32 to vector<8x256xi32>
    %170 = arith.addi %167, %169 : vector<8x256xi32>
    %c0_i32_73 = arith.constant 0 : i32
    %171 = vector.broadcast %c0_i32_73 : i32 to vector<8x256xi32>
    %172 = arith.cmpi sge, %170, %171 : vector<8x256xi32>
    %c-4_i32_74 = arith.constant -4 : i32
    %173 = vector.broadcast %c-4_i32_74 : i32 to vector<8x256xi32>
    %174 = arith.addi %167, %173 : vector<8x256xi32>
    %c128_i32_75 = arith.constant 128 : i32
    %175 = vector.broadcast %c128_i32_75 : i32 to vector<8x256xi32>
    %176 = arith.cmpi slt, %174, %175 : vector<8x256xi32>
    %177 = arith.andi %172, %176 : vector<8x256xi1>
    %cst_76 = arith.constant 0.000000e+00 : f32
    %178 = vector.broadcast %cst_76 : f32 to vector<8x256xf32>
    %179 = arith.select %177, %168, %178 : vector<8x256xi1>, vector<8x256xf32>
    %c0_77 = arith.constant 0 : index
    %c0_78 = arith.constant 0 : index
    %180 = vector.load %arg10[%c0_77, %c0_78] : memref<72x256xf32, #tpu.memory_space<vmem>>, vector<8x256xf32>
    tpu.vector_store %arg10[%c0_77, %c0_78], %179 {strides = array<i32>} : memref<72x256xf32, #tpu.memory_space<vmem>>, vector<8x256xf32>,
    %c3_i32_79 = arith.constant 3 : i32
    %181 = tpu.dynamic_rotate %150 by %c3_i32_79 dim 1 : vector<8x256xf32>, i32 -> vector<8x256xf32>
    %c-3_i32_80 = arith.constant -3 : i32
    %182 = vector.broadcast %c-3_i32_80 : i32 to vector<8x256xi32>
    %183 = arith.addi %167, %182 : vector<8x256xi32>
    %c0_i32_81 = arith.constant 0 : i32
    %184 = vector.broadcast %c0_i32_81 : i32 to vector<8x256xi32>
    %185 = arith.cmpi sge, %183, %184 : vector<8x256xi32>
    %c-3_i32_82 = arith.constant -3 : i32
    %186 = vector.broadcast %c-3_i32_82 : i32 to vector<8x256xi32>
    %187 = arith.addi %167, %186 : vector<8x256xi32>
    %c128_i32_83 = arith.constant 128 : i32
    %188 = vector.broadcast %c128_i32_83 : i32 to vector<8x256xi32>
    %189 = arith.cmpi slt, %187, %188 : vector<8x256xi32>
    %190 = arith.andi %185, %189 : vector<8x256xi1>
    %cst_84 = arith.constant 0.000000e+00 : f32
    %191 = vector.broadcast %cst_84 : f32 to vector<8x256xf32>
    %192 = arith.select %190, %181, %191 : vector<8x256xi1>, vector<8x256xf32>
    %c8_85 = arith.constant 8 : index
    %c0_86 = arith.constant 0 : index
    %193 = vector.load %arg10[%c8_85, %c0_86] : memref<72x256xf32, #tpu.memory_space<vmem>>, vector<8x256xf32>
    tpu.vector_store %arg10[%c8_85, %c0_86], %192 {strides = array<i32>} : memref<72x256xf32, #tpu.memory_space<vmem>>, vector<8x256xf32>,
    %c2_i32_87 = arith.constant 2 : i32
    %194 = tpu.dynamic_rotate %150 by %c2_i32_87 dim 1 : vector<8x256xf32>, i32 -> vector<8x256xf32>
    %c-2_i32_88 = arith.constant -2 : i32
    %195 = vector.broadcast %c-2_i32_88 : i32 to vector<8x256xi32>
    %196 = arith.addi %167, %195 : vector<8x256xi32>
    %c0_i32_89 = arith.constant 0 : i32
    %197 = vector.broadcast %c0_i32_89 : i32 to vector<8x256xi32>
    %198 = arith.cmpi sge, %196, %197 : vector<8x256xi32>
    %c-2_i32_90 = arith.constant -2 : i32
    %199 = vector.broadcast %c-2_i32_90 : i32 to vector<8x256xi32>
    %200 = arith.addi %167, %199 : vector<8x256xi32>
    %c128_i32_91 = arith.constant 128 : i32
    %201 = vector.broadcast %c128_i32_91 : i32 to vector<8x256xi32>
    %202 = arith.cmpi slt, %200, %201 : vector<8x256xi32>
    %203 = arith.andi %198, %202 : vector<8x256xi1>
    %cst_92 = arith.constant 0.000000e+00 : f32
    %204 = vector.broadcast %cst_92 : f32 to vector<8x256xf32>
    %205 = arith.select %203, %194, %204 : vector<8x256xi1>, vector<8x256xf32>
    %c16_93 = arith.constant 16 : index
    %c0_94 = arith.constant 0 : index
    %206 = vector.load %arg10[%c16_93, %c0_94] : memref<72x256xf32, #tpu.memory_space<vmem>>, vector<8x256xf32>
    tpu.vector_store %arg10[%c16_93, %c0_94], %205 {strides = array<i32>} : memref<72x256xf32, #tpu.memory_space<vmem>>, vector<8x256xf32>,
    %c1_i32_95 = arith.constant 1 : i32
    %207 = tpu.dynamic_rotate %150 by %c1_i32_95 dim 1 : vector<8x256xf32>, i32 -> vector<8x256xf32>
    %c-1_i32_96 = arith.constant -1 : i32
    %208 = vector.broadcast %c-1_i32_96 : i32 to vector<8x256xi32>
    %209 = arith.addi %167, %208 : vector<8x256xi32>
    %c0_i32_97 = arith.constant 0 : i32
    %210 = vector.broadcast %c0_i32_97 : i32 to vector<8x256xi32>
    %211 = arith.cmpi sge, %209, %210 : vector<8x256xi32>
    %c-1_i32_98 = arith.constant -1 : i32
    %212 = vector.broadcast %c-1_i32_98 : i32 to vector<8x256xi32>
    %213 = arith.addi %167, %212 : vector<8x256xi32>
    %c128_i32_99 = arith.constant 128 : i32
    %214 = vector.broadcast %c128_i32_99 : i32 to vector<8x256xi32>
    %215 = arith.cmpi slt, %213, %214 : vector<8x256xi32>
    %216 = arith.andi %211, %215 : vector<8x256xi1>
    %cst_100 = arith.constant 0.000000e+00 : f32
    %217 = vector.broadcast %cst_100 : f32 to vector<8x256xf32>
    %218 = arith.select %216, %207, %217 : vector<8x256xi1>, vector<8x256xf32>
    %c24_101 = arith.constant 24 : index
    %c0_102 = arith.constant 0 : index
    %219 = vector.load %arg10[%c24_101, %c0_102] : memref<72x256xf32, #tpu.memory_space<vmem>>, vector<8x256xf32>
    tpu.vector_store %arg10[%c24_101, %c0_102], %218 {strides = array<i32>} : memref<72x256xf32, #tpu.memory_space<vmem>>, vector<8x256xf32>,
    %c32_103 = arith.constant 32 : index
    %c0_104 = arith.constant 0 : index
    %220 = vector.load %arg10[%c32_103, %c0_104] : memref<72x256xf32, #tpu.memory_space<vmem>>, vector<8x256xf32>
    tpu.vector_store %arg10[%c32_103, %c0_104], %150 {strides = array<i32>} : memref<72x256xf32, #tpu.memory_space<vmem>>, vector<8x256xf32>,
    %c255_i32_105 = arith.constant 255 : i32
    %221 = tpu.dynamic_rotate %150 by %c255_i32_105 dim 1 : vector<8x256xf32>, i32 -> vector<8x256xf32>
    %c1_i32_106 = arith.constant 1 : i32
    %222 = vector.broadcast %c1_i32_106 : i32 to vector<8x256xi32>
    %223 = arith.addi %167, %222 : vector<8x256xi32>
    %c0_i32_107 = arith.constant 0 : i32
    %224 = vector.broadcast %c0_i32_107 : i32 to vector<8x256xi32>
    %225 = arith.cmpi sge, %223, %224 : vector<8x256xi32>
    %c1_i32_108 = arith.constant 1 : i32
    %226 = vector.broadcast %c1_i32_108 : i32 to vector<8x256xi32>
    %227 = arith.addi %167, %226 : vector<8x256xi32>
    %c128_i32_109 = arith.constant 128 : i32
    %228 = vector.broadcast %c128_i32_109 : i32 to vector<8x256xi32>
    %229 = arith.cmpi slt, %227, %228 : vector<8x256xi32>
    %230 = arith.andi %225, %229 : vector<8x256xi1>
    %cst_110 = arith.constant 0.000000e+00 : f32
    %231 = vector.broadcast %cst_110 : f32 to vector<8x256xf32>
    %232 = arith.select %230, %221, %231 : vector<8x256xi1>, vector<8x256xf32>
    %c40 = arith.constant 40 : index
    %c0_111 = arith.constant 0 : index
    %233 = vector.load %arg10[%c40, %c0_111] : memref<72x256xf32, #tpu.memory_space<vmem>>, vector<8x256xf32>
    tpu.vector_store %arg10[%c40, %c0_111], %232 {strides = array<i32>} : memref<72x256xf32, #tpu.memory_space<vmem>>, vector<8x256xf32>,
    %c254_i32_112 = arith.constant 254 : i32
    %234 = tpu.dynamic_rotate %150 by %c254_i32_112 dim 1 : vector<8x256xf32>, i32 -> vector<8x256xf32>
    %c2_i32_113 = arith.constant 2 : i32
    %235 = vector.broadcast %c2_i32_113 : i32 to vector<8x256xi32>
    %236 = arith.addi %167, %235 : vector<8x256xi32>
    %c0_i32_114 = arith.constant 0 : i32
    %237 = vector.broadcast %c0_i32_114 : i32 to vector<8x256xi32>
    %238 = arith.cmpi sge, %236, %237 : vector<8x256xi32>
    %c2_i32_115 = arith.constant 2 : i32
    %239 = vector.broadcast %c2_i32_115 : i32 to vector<8x256xi32>
    %240 = arith.addi %167, %239 : vector<8x256xi32>
    %c128_i32_116 = arith.constant 128 : i32
    %241 = vector.broadcast %c128_i32_116 : i32 to vector<8x256xi32>
    %242 = arith.cmpi slt, %240, %241 : vector<8x256xi32>
    %243 = arith.andi %238, %242 : vector<8x256xi1>
    %cst_117 = arith.constant 0.000000e+00 : f32
    %244 = vector.broadcast %cst_117 : f32 to vector<8x256xf32>
    %245 = arith.select %243, %234, %244 : vector<8x256xi1>, vector<8x256xf32>
    %c48 = arith.constant 48 : index
    %c0_118 = arith.constant 0 : index
    %246 = vector.load %arg10[%c48, %c0_118] : memref<72x256xf32, #tpu.memory_space<vmem>>, vector<8x256xf32>
    tpu.vector_store %arg10[%c48, %c0_118], %245 {strides = array<i32>} : memref<72x256xf32, #tpu.memory_space<vmem>>, vector<8x256xf32>,
    %c253_i32_119 = arith.constant 253 : i32
    %247 = tpu.dynamic_rotate %150 by %c253_i32_119 dim 1 : vector<8x256xf32>, i32 -> vector<8x256xf32>
    %c3_i32_120 = arith.constant 3 : i32
    %248 = vector.broadcast %c3_i32_120 : i32 to vector<8x256xi32>
    %249 = arith.addi %167, %248 : vector<8x256xi32>
    %c0_i32_121 = arith.constant 0 : i32
    %250 = vector.broadcast %c0_i32_121 : i32 to vector<8x256xi32>
    %251 = arith.cmpi sge, %249, %250 : vector<8x256xi32>
    %c3_i32_122 = arith.constant 3 : i32
    %252 = vector.broadcast %c3_i32_122 : i32 to vector<8x256xi32>
    %253 = arith.addi %167, %252 : vector<8x256xi32>
    %c128_i32_123 = arith.constant 128 : i32
    %254 = vector.broadcast %c128_i32_123 : i32 to vector<8x256xi32>
    %255 = arith.cmpi slt, %253, %254 : vector<8x256xi32>
    %256 = arith.andi %251, %255 : vector<8x256xi1>
    %cst_124 = arith.constant 0.000000e+00 : f32
    %257 = vector.broadcast %cst_124 : f32 to vector<8x256xf32>
    %258 = arith.select %256, %247, %257 : vector<8x256xi1>, vector<8x256xf32>
    %c56 = arith.constant 56 : index
    %c0_125 = arith.constant 0 : index
    %259 = vector.load %arg10[%c56, %c0_125] : memref<72x256xf32, #tpu.memory_space<vmem>>, vector<8x256xf32>
    tpu.vector_store %arg10[%c56, %c0_125], %258 {strides = array<i32>} : memref<72x256xf32, #tpu.memory_space<vmem>>, vector<8x256xf32>,
    %c252_i32_126 = arith.constant 252 : i32
    %260 = tpu.dynamic_rotate %150 by %c252_i32_126 dim 1 : vector<8x256xf32>, i32 -> vector<8x256xf32>
    %c4_i32_127 = arith.constant 4 : i32
    %261 = vector.broadcast %c4_i32_127 : i32 to vector<8x256xi32>
    %262 = arith.addi %167, %261 : vector<8x256xi32>
    %c0_i32_128 = arith.constant 0 : i32
    %263 = vector.broadcast %c0_i32_128 : i32 to vector<8x256xi32>
    %264 = arith.cmpi sge, %262, %263 : vector<8x256xi32>
    %c4_i32_129 = arith.constant 4 : i32
    %265 = vector.broadcast %c4_i32_129 : i32 to vector<8x256xi32>
    %266 = arith.addi %167, %265 : vector<8x256xi32>
    %c128_i32_130 = arith.constant 128 : i32
    %267 = vector.broadcast %c128_i32_130 : i32 to vector<8x256xi32>
    %268 = arith.cmpi slt, %266, %267 : vector<8x256xi32>
    %269 = arith.andi %264, %268 : vector<8x256xi1>
    %cst_131 = arith.constant 0.000000e+00 : f32
    %270 = vector.broadcast %cst_131 : f32 to vector<8x256xf32>
    %271 = arith.select %269, %260, %270 : vector<8x256xi1>, vector<8x256xf32>
    %c64 = arith.constant 64 : index
    %c0_132 = arith.constant 0 : index
    %272 = vector.load %arg10[%c64, %c0_132] : memref<72x256xf32, #tpu.memory_space<vmem>>, vector<8x256xf32>
    tpu.vector_store %arg10[%c64, %c0_132], %271 {strides = array<i32>} : memref<72x256xf32, #tpu.memory_space<vmem>>, vector<8x256xf32>,
    %c0_133 = arith.constant 0 : index
    %c0_134 = arith.constant 0 : index
    %273 = vector.load %arg4[%c0_133, %c0_134] : memref<8x72xf32, #tpu.memory_space<vmem>>, vector<8x72xf32>
    %c0_135 = arith.constant 0 : index
    %c0_136 = arith.constant 0 : index
    %274 = vector.load %arg10[%c0_135, %c0_136] : memref<72x256xf32, #tpu.memory_space<vmem>>, vector<72x256xf32>
    %cst_137 = arith.constant dense<0.000000e+00> : vector<8x256xf32>
    %275 = tpu.matmul %273, %274, %cst_137 {dimension_numbers = #tpu.dot_dimension_numbers<[1], [0], [0], [1], [0, 0, 1, 1], [], []>} : vector<8x72xf32>, vector<72x256xf32>, vector<8x256xf32> -> vector<8x256xf32>
    %c0_138 = arith.constant 0 : index
    %c0_139 = arith.constant 0 : index
    %276 = vector.load %arg5[%c0_138, %c0_139] : memref<8x1xf32, #tpu.memory_space<vmem>>, vector<8x1xf32>
    %c0_140 = arith.constant 0 : index
    %c0_141 = arith.constant 0 : index
    %277 = vector.load %arg6[%c0_140, %c0_141] : memref<8x1xf32, #tpu.memory_space<vmem>>, vector<8x1xf32>
    %cst_142 = arith.constant dense<0.000000e+00> : vector<8xf32>
    %278 = vector.multi_reduction <add>, %275, %cst_142 [1] : vector<8x256xf32> to vector<8xf32>
    %279 = vector.shape_cast %278 : vector<8xf32> to vector<8x1xf32>
    %280 = arith.mulf %275, %275 : vector<8x256xf32>
    %cst_143 = arith.constant dense<0.000000e+00> : vector<8xf32>
    %281 = vector.multi_reduction <add>, %280, %cst_143 [1] : vector<8x256xf32> to vector<8xf32>
    %282 = vector.shape_cast %281 : vector<8xf32> to vector<8x1xf32>
    %cst_144 = arith.constant 3.906250e-03 : f32
    %283 = vector.broadcast %cst_144 : f32 to vector<8x1xf32>
    %284 = arith.mulf %279, %283 : vector<8x1xf32>
    %cst_145 = arith.constant 3.906250e-03 : f32
    %285 = vector.broadcast %cst_145 : f32 to vector<8x1xf32>
    %286 = arith.mulf %282, %285 : vector<8x1xf32>
    %287 = arith.mulf %284, %284 : vector<8x1xf32>
    %288 = arith.subf %286, %287 : vector<8x1xf32>
    %cst_146 = arith.constant 9.99999974E-6 : f32
    %289 = vector.broadcast %cst_146 : f32 to vector<8x1xf32>
    %290 = arith.addf %288, %289 : vector<8x1xf32>
    %291 = math.rsqrt %290 : vector<8x1xf32>
    %292 = arith.mulf %276, %291 : vector<8x1xf32>
    %293 = arith.mulf %284, %292 : vector<8x1xf32>
    %294 = arith.subf %277, %293 : vector<8x1xf32>
    %c0_147 = arith.constant 0 : index
    %c0_148 = arith.constant 0 : index
    %295 = vector.load %arg7[%c0_147, %c0_148] : memref<8x4xf32, #tpu.memory_space<vmem>>, vector<8x4xf32>
    %cst_149 = arith.constant dense<0.000000e+00> : vector<8x256xf32>
    %296 = tpu.matmul %295, %0, %cst_149 {dimension_numbers = #tpu.dot_dimension_numbers<[1], [0], [0], [1], [0, 0, 1, 1], [], []>} : vector<8x4xf32>, vector<4x256xf32>, vector<8x256xf32> -> vector<8x256xf32>
    %297 = vector.broadcast %292 : vector<8x1xf32> to vector<8x256xf32>
    %298 = arith.mulf %275, %297 : vector<8x256xf32>
    %299 = vector.broadcast %294 : vector<8x1xf32> to vector<8x256xf32>
    %300 = arith.addf %298, %299 : vector<8x256xf32>
    %cst_150 = arith.constant 0.000000e+00 : f32
    %301 = vector.broadcast %cst_150 : f32 to vector<8x256xf32>
    %302 = arith.maximumf %300, %301 : vector<8x256xf32>
    %303 = arith.addf %302, %296 : vector<8x256xf32>
    %c0_151 = arith.constant 0 : index
    %c0_152 = arith.constant 0 : index
    %304 = vector.load %arg8[%c0_151, %c0_152] : memref<8x1xf32, #tpu.memory_space<vmem>>, vector<8x1xf32>
    %305 = vector.broadcast %304 : vector<8x1xf32> to vector<8x256xf32>
    %306 = arith.addf %303, %305 : vector<8x256xf32>
    %c0_153 = arith.constant 0 : index
    %c0_154 = arith.constant 0 : index
    %307 = vector.load %arg9[%c0_153, %c0_154] : memref<8x256xf32, #tpu.memory_space<vmem>>, vector<8x256xf32>
    tpu.vector_store %arg9[%c0_153, %c0_154], %306 {strides = array<i32>} : memref<8x256xf32, #tpu.memory_space<vmem>>, vector<8x256xf32>,
    return
  }
}

</mosaic_0001>

<llo_original>
// kernel: tpu_custom_call.1
$region0: #{tpu_custom_call.1}
  #allocation0 [shape = 'u32[]', space=smem, size = 0x4, offset = 0x4, fixed_abs, tag = 'smem constant byte address 0x4 - core index']
  #allocation1 [shape = 'u32[72,128]{1,0:T(1,128)}', space=vmem, size = 0x9000, scoped, tag = 'internal scratch']
  #allocation2 [shape = 'f32[72,256]{1,0:T(8,128)}', space=vmem, size = 0x12000, scoped, tag = 'scratch operand']
  %s0 = inlined_call_operand.vmem [shape: f32[4,256], index: 0, kind: input, shape index: {}]
  %s1 = inlined_call_operand.vmem [shape: f32[8,36], index: 1, kind: input, shape index: {}]
  %s2 = inlined_call_operand.vmem [shape: f32[8,1], index: 2, kind: input, shape index: {}]
  %s3 = inlined_call_operand.vmem [shape: f32[8,1], index: 3, kind: input, shape index: {}]
  %s4 = inlined_call_operand.vmem [shape: f32[8,72], index: 4, kind: input, shape index: {}]
  %s5 = inlined_call_operand.vmem [shape: f32[8,1], index: 5, kind: input, shape index: {}]
  %s6 = inlined_call_operand.vmem [shape: f32[8,1], index: 6, kind: input, shape index: {}]
  %s7 = inlined_call_operand.vmem [shape: f32[8,4], index: 7, kind: input, shape index: {}]
  %s8 = inlined_call_operand.vmem [shape: f32[8,1], index: 8, kind: input, shape index: {}]
  %s9 = inlined_call_operand.hbm [shape: f32[8,256], index: 9, kind: output, shape index: {}]
  %s10 = sld [smem:[#allocation0]]
  $region46: #{tpu_custom_call.1} parent=0
    _
  %s12 = ssub.s32 1, %s10
  %s13 = scalar_select 0, %s12, %s10
  $region1: #{tpu_custom_call.1} parent=0
    #allocation3 [shape = 'u8[8192]{0}', space=vmem, size = 0x2000, scoped, tag = 'output window, operand 0, single buffered']
    #allocation4 [shape = 's32[1]{0}', space=sflag, size = 0x4, scoped, tag = 'scoped memory for tpu_custom_call.1']
    %14 = vsyncpa [#allocation4], 0
    // Predicated region
    $region2: #{tpu_custom_call.1} parent=1 // pred_check
      _
    $region3: #{tpu_custom_call.1} parent=1 // pred_check_branch
      %16 = sbr.rel (0) target = $region5
    $region4: #{tpu_custom_call.1} parent=1 // pred_region
      _
    $region5: #{tpu_custom_call.1} parent=1 // pred_fallthru
      _
    // Predicated region
    $region6: #{tpu_custom_call.1} parent=1 // pred_check
      _
    $region7: #{tpu_custom_call.1} parent=1 // pred_check_branch
      %18 = sbr.rel (0) target = $region9
    $region8: #{tpu_custom_call.1} parent=1 // pred_region
      _
    $region9: #{tpu_custom_call.1} parent=1 // pred_fallthru
      _
    // Predicated region
    $region10: #{tpu_custom_call.1} parent=1 // pred_check
      _
    $region11: #{tpu_custom_call.1} parent=1 // pred_check_branch
      %20 = sbr.rel (0) target = $region13
    $region12: #{tpu_custom_call.1} parent=1 // pred_region
      _
    $region13: #{tpu_custom_call.1} parent=1 // pred_fallthru
      _
    // Predicated region
    $region14: #{tpu_custom_call.1} parent=1 // pred_check
      _
    $region15: #{tpu_custom_call.1} parent=1 // pred_check_branch
      %22 = sbr.rel (0) target = $region17
    $region16: #{tpu_custom_call.1} parent=1 // pred_region
      _
    $region17: #{tpu_custom_call.1} parent=1 // pred_fallthru
      _
    // Predicated region
    $region18: #{tpu_custom_call.1} parent=1 // pred_check
      _
    $region19: #{tpu_custom_call.1} parent=1 // pred_check_branch
      %24 = sbr.rel (0) target = $region21
    $region20: #{tpu_custom_call.1} parent=1 // pred_region
      _
    $region21: #{tpu_custom_call.1} parent=1 // pred_fallthru
      _
    // Predicated region
    $region22: #{tpu_custom_call.1} parent=1 // pred_check
      _
    $region23: #{tpu_custom_call.1} parent=1 // pred_check_branch
      %26 = sbr.rel (0) target = $region25
    $region24: #{tpu_custom_call.1} parent=1 // pred_region
      _
    $region25: #{tpu_custom_call.1} parent=1 // pred_fallthru
      _
    // Predicated region
    $region26: #{tpu_custom_call.1} parent=1 // pred_check
      _
    $region27: #{tpu_custom_call.1} parent=1 // pred_check_branch
      %28 = sbr.rel (0) target = $region29
    $region28: #{tpu_custom_call.1} parent=1 // pred_region
      _
    $region29: #{tpu_custom_call.1} parent=1 // pred_fallthru
      _
    // Predicated region
    $region30: #{tpu_custom_call.1} parent=1 // pred_check
      _
    $region31: #{tpu_custom_call.1} parent=1 // pred_check_branch
      %30 = sbr.rel (0) target = $region33
    $region32: #{tpu_custom_call.1} parent=1 // pred_region
      _
    $region33: #{tpu_custom_call.1} parent=1 // pred_fallthru
      _
    // Predicated region
    $region34: #{tpu_custom_call.1} parent=1 // pred_check
      _
    $region35: #{tpu_custom_call.1} parent=1 // pred_check_branch
      %32 = sbr.rel (0) target = $region37
    $region36: #{tpu_custom_call.1} parent=1 // pred_region
      _
    $region37: #{tpu_custom_call.1} parent=1 // pred_fallthru
      _
    %v33 = vld [vmem:[%s0] sm:$0xff]
    %v34 = vlaneseq
    %v35 = vand.u32 %v34, 127
    %v36 = vadd.s32 %v35, 128
    %vm37 = vcmp.lt.s32.totalorder %v35, 0
    %v38 = vsub.s32 0, %v35
    %v39 = vsel %vm37, %v38, %v35
    %v40 = vshrl.u32 %v39, 7
    %v41 = vand.u32 %v39, 127
    %v42 = vsub.s32 0, %v41
    %v43 = vsel %vm37, %v42, %v41
    %vm44 = vcmp.lt.s32.totalorder %v36, 0
    %v45 = vsub.s32 0, %v36
    %v46 = vsel %vm44, %v45, %v36
    %v47 = vshrl.u32 %v46, 7
    %v48 = vand.u32 %v46, 127
    %v49 = vsub.s32 0, %v48
    %v50 = vsel %vm44, %v49, %v48
    %vm51 = vcmp.ne.s32.totalorder %v43, 0
    %vm52 = vcmp.ne.s32.totalorder %v50, 0
    %vm53 = vcmp.lt.s32.totalorder %v43, 0
    %vm54 = vcmp.lt.s32.totalorder %v50, 0
    %vm55 = vmand %vm53, %vm51
    %vm56 = vmand %vm54, %vm52
    %v57 = vadd.s32 %v43, 128
    %v58 = vadd.s32 %v50, 128
    %v59 = vsel %vm55, %v57, %v43
    %v60 = vsel %vm56, %v58, %v50
    %62 = vst [vmem:[#allocation1] ss:$2 sm:$0xff] %v33
    %v63 = vld.sshfl [vmem:[#allocation1] sm:$0xff pattern:$0x75316420]
    %v64 = vld.sshfl [vmem:[#allocation1 + $0x8] sm:$0xff pattern:$0x75316420]
    %67 = vrot.lane.b32.xlu0 %v63, 4
    %v68 = vpop.permute.xlu0 %67
    %69 = vrot.lane.b32.xlu0 %v64, 4
    %v70 = vpop.permute.xlu0 %69
    %vm71 = vcmp.lt.s32.totalorder %v35, 4
    %v72 = vsel %vm71, %v68, %v70
    %v73 = vsel %vm71, %v70, %v68
    %v74 = vadd.s32 %v59, 4294967292
    %v75 = vadd.s32 %v60, 4294967292
    %vm76 = vcmp.ge.s32.totalorder %v74, 0
    %vm77 = vcmp.ge.s32.totalorder %v75, 0
    %vm78 = vcmp.lt.s32.totalorder %v74, 128
    %vm79 = vcmp.lt.s32.totalorder %v75, 128
    %vm80 = vmand %vm76, %vm78
    %vm81 = vmand %vm77, %vm79
    %v82 = vsel %vm80, %v73, 0.0
    %v83 = vsel %vm81, %v72, 0.0
    %84 = vst [vmem:[#allocation2] sm:$0xf] %v82
    %85 = vst [vmem:[#allocation2 + $0x8] sm:$0xf] %v83
    %86 = vst [vmem:[#allocation1] ss:$2 sm:$0xff] %v33
    %v87 = vld.sshfl [vmem:[#allocation1] sm:$0xff pattern:$0x75316420]
    %v88 = vld.sshfl [vmem:[#allocation1 + $0x8] sm:$0xff pattern:$0x75316420]
    %91 = vrot.lane.b32.xlu0 %v87, 3
    %v92 = vpop.permute.xlu0 %91
    %93 = vrot.lane.b32.xlu0 %v88, 3
    %v94 = vpop.permute.xlu0 %93
    %vm95 = vcmp.lt.s32.totalorder %v35, 3
    %v96 = vsel %vm95, %v92, %v94
    %v97 = vsel %vm95, %v94, %v92
    %v98 = vadd.s32 %v59, 4294967293
    %v99 = vadd.s32 %v60, 4294967293
    %vm100 = vcmp.ge.s32.totalorder %v98, 0
    %vm101 = vcmp.ge.s32.totalorder %v99, 0
    %vm102 = vcmp.lt.s32.totalorder %v98, 128
    %vm103 = vcmp.lt.s32.totalorder %v99, 128
    %vm104 = vmand %vm100, %vm102
    %vm105 = vmand %vm101, %vm103
    %v106 = vsel %vm104, %v97, 0.0
    %v107 = vsel %vm105, %v96, 0.0
    %v110 = vrot.slane %v106, 4
    %v111 = vrot.slane %v107, 4
    %114 = vst [vmem:[#allocation2] sm:$0xf0] %v110
    %115 = vst [vmem:[#allocation2 + $0x8] sm:$0xf0] %v111
    %116 = vst [vmem:[#allocation1] ss:$2 sm:$0xff] %v33
    %v117 = vld.sshfl [vmem:[#allocation1] sm:$0xff pattern:$0x75316420]
    %v118 = vld.sshfl [vmem:[#allocation1 + $0x8] sm:$0xff pattern:$0x75316420]
    %121 = vrot.lane.b32.xlu0 %v117, 2
    %v122 = vpop.permute.xlu0 %121
    %123 = vrot.lane.b32.xlu0 %v118, 2
    %v124 = vpop.permute.xlu0 %123
    %vm125 = vcmp.lt.s32.totalorder %v35, 2
    %v126 = vsel %vm125, %v122, %v124
    %v127 = vsel %vm125, %v124, %v122
    %v128 = vadd.s32 %v59, 4294967294
    %v129 = vadd.s32 %v60, 4294967294
    %vm130 = vcmp.ge.s32.totalorder %v128, 0
    %vm131 = vcmp.ge.s32.totalorder %v129, 0
    %vm132 = vcmp.lt.s32.totalorder %v128, 128
    %vm133 = vcmp.lt.s32.totalorder %v129, 128
    %vm134 = vmand %vm130, %vm132
    %vm135 = vmand %vm131, %vm133
    %v136 = vsel %vm134, %v127, 0.0
    %v137 = vsel %vm135, %v126, 0.0
    %138 = vst [vmem:[#allocation2 + $0x10] sm:$0xf] %v136
    %139 = vst [vmem:[#allocation2 + $0x18] sm:$0xf] %v137
    %140 = vst [vmem:[#allocation1] ss:$2 sm:$0xff] %v33
    %v141 = vld.sshfl [vmem:[#allocation1] sm:$0xff pattern:$0x75316420]
    %v142 = vld.sshfl [vmem:[#allocation1 + $0x8] sm:$0xff pattern:$0x75316420]
    %145 = vrot.lane.b32.xlu0 %v141, 1
    %v146 = vpop.permute.xlu0 %145
    %147 = vrot.lane.b32.xlu0 %v142, 1
    %v148 = vpop.permute.xlu0 %147
    %vm149 = vcmp.lt.s32.totalorder %v35, 1
    %v150 = vsel %vm149, %v146, %v148
    %v151 = vsel %vm149, %v148, %v146
    %v152 = vadd.s32 %v59, 4294967295
    %v153 = vadd.s32 %v60, 4294967295
    %vm154 = vcmp.ge.s32.totalorder %v152, 0
    %vm155 = vcmp.ge.s32.totalorder %v153, 0
    %vm156 = vcmp.lt.s32.totalorder %v152, 128
    %vm157 = vcmp.lt.s32.totalorder %v153, 128
    %vm158 = vmand %vm154, %vm156
    %vm159 = vmand %vm155, %vm157
    %v160 = vsel %vm158, %v151, 0.0
    %v161 = vsel %vm159, %v150, 0.0
    %v164 = vrot.slane %v160, 4
    %v165 = vrot.slane %v161, 4
    %168 = vst [vmem:[#allocation2 + $0x10] sm:$0xf0] %v164
    %169 = vst [vmem:[#allocation2 + $0x18] sm:$0xf0] %v165
    %170 = vst [vmem:[#allocation1] ss:$2 sm:$0xff] %v33
    %v171 = vld.sshfl [vmem:[#allocation1] sm:$0xff pattern:$0x75316420]
    %v172 = vld.sshfl [vmem:[#allocation1 + $0x8] sm:$0xff pattern:$0x75316420]
    %175 = vst [vmem:[#allocation2 + $0x20] sm:$0xf] %v171
    %176 = vst [vmem:[#allocation2 + $0x28] sm:$0xf] %v172
    %177 = vst [vmem:[#allocation1] ss:$2 sm:$0xff] %v33
    %v178 = vld.sshfl [vmem:[#allocation1] sm:$0xff pattern:$0x75316420]
    %v179 = vld.sshfl [vmem:[#allocation1 + $0x8] sm:$0xff pattern:$0x75316420]
    %182 = vrot.lane.b32.xlu0 %v178, 127
    %v183 = vpop.permute.xlu0 %182
    %184 = vrot.lane.b32.xlu0 %v179, 127
    %v185 = vpop.permute.xlu0 %184
    %vm186 = vcmp.lt.s32.totalorder %v35, 127
    %v187 = vsel %vm186, %v183, %v185
    %v188 = vsel %vm186, %v185, %v183
    %v189 = vadd.s32 %v59, 1
    %v190 = vadd.s32 %v60, 1
    %vm191 = vcmp.ge.s32.totalorder %v189, 0
    %vm192 = vcmp.ge.s32.totalorder %v190, 0
    %vm193 = vcmp.lt.s32.totalorder %v189, 128
    %vm194 = vcmp.lt.s32.totalorder %v190, 128
    %vm195 = vmand %vm191, %vm193
    %vm196 = vmand %vm192, %vm194
    %v197 = vsel %vm195, %v187, 0.0
    %v198 = vsel %vm196, %v188, 0.0
    %v201 = vrot.slane %v197, 4
    %v202 = vrot.slane %v198, 4
    %205 = vst [vmem:[#allocation2 + $0x20] sm:$0xf0] %v201
    %206 = vst [vmem:[#allocation2 + $0x28] sm:$0xf0] %v202
    %207 = vst [vmem:[#allocation1] ss:$2 sm:$0xff] %v33
    %v208 = vld.sshfl [vmem:[#allocation1] sm:$0xff pattern:$0x75316420]
    %v209 = vld.sshfl [vmem:[#allocation1 + $0x8] sm:$0xff pattern:$0x75316420]
    %212 = vrot.lane.b32.xlu0 %v208, 126
    %v213 = vpop.permute.xlu0 %212
    %214 = vrot.lane.b32.xlu0 %v209, 126
    %v215 = vpop.permute.xlu0 %214
    %vm216 = vcmp.lt.s32.totalorder %v35, 126
    %v217 = vsel %vm216, %v213, %v215
    %v218 = vsel %vm216, %v215, %v213
    %v219 = vadd.s32 %v59, 2
    %v220 = vadd.s32 %v60, 2
    %vm221 = vcmp.ge.s32.totalorder %v219, 0
    %vm222 = vcmp.ge.s32.totalorder %v220, 0
    %vm223 = vcmp.lt.s32.totalorder %v219, 128
    %vm224 = vcmp.lt.s32.totalorder %v220, 128
    %vm225 = vmand %vm221, %vm223
    %vm226 = vmand %vm222, %vm224
    %v227 = vsel %vm225, %v217, 0.0
    %v228 = vsel %vm226, %v218, 0.0
    %229 = vst [vmem:[#allocation2 + $0x30] sm:$0xf] %v227
    %230 = vst [vmem:[#allocation2 + $0x38] sm:$0xf] %v228
    %231 = vst [vmem:[#allocation1] ss:$2 sm:$0xff] %v33
    %v232 = vld.sshfl [vmem:[#allocation1] sm:$0xff pattern:$0x75316420]
    %v233 = vld.sshfl [vmem:[#allocation1 + $0x8] sm:$0xff pattern:$0x75316420]
    %236 = vrot.lane.b32.xlu0 %v232, 125
    %v237 = vpop.permute.xlu0 %236
    %238 = vrot.lane.b32.xlu0 %v233, 125
    %v239 = vpop.permute.xlu0 %238
    %vm240 = vcmp.lt.s32.totalorder %v35, 125
    %v241 = vsel %vm240, %v237, %v239
    %v242 = vsel %vm240, %v239, %v237
    %v243 = vadd.s32 %v59, 3
    %v244 = vadd.s32 %v60, 3
    %vm245 = vcmp.ge.s32.totalorder %v243, 0
    %vm246 = vcmp.ge.s32.totalorder %v244, 0
    %vm247 = vcmp.lt.s32.totalorder %v243, 128
    %vm248 = vcmp.lt.s32.totalorder %v244, 128
    %vm249 = vmand %vm245, %vm247
    %vm250 = vmand %vm246, %vm248
    %v251 = vsel %vm249, %v241, 0.0
    %v252 = vsel %vm250, %v242, 0.0
    %v255 = vrot.slane %v251, 4
    %v256 = vrot.slane %v252, 4
    %259 = vst [vmem:[#allocation2 + $0x30] sm:$0xf0] %v255
    %260 = vst [vmem:[#allocation2 + $0x38] sm:$0xf0] %v256
    %261 = vst [vmem:[#allocation1] ss:$2 sm:$0xff] %v33
    %v262 = vld.sshfl [vmem:[#allocation1] sm:$0xff pattern:$0x75316420]
    %v263 = vld.sshfl [vmem:[#allocation1 + $0x8] sm:$0xff pattern:$0x75316420]
    %266 = vrot.lane.b32.xlu0 %v262, 124
    %v267 = vpop.permute.xlu0 %266
    %268 = vrot.lane.b32.xlu0 %v263, 124
    %v269 = vpop.permute.xlu0 %268
    %vm270 = vcmp.lt.s32.totalorder %v35, 124
    %v271 = vsel %vm270, %v267, %v269
    %v272 = vsel %vm270, %v269, %v267
    %v273 = vadd.s32 %v59, 4
    %v274 = vadd.s32 %v60, 4
    %vm275 = vcmp.ge.s32.totalorder %v273, 0
    %vm276 = vcmp.ge.s32.totalorder %v274, 0
    %vm277 = vcmp.lt.s32.totalorder %v273, 128
    %vm278 = vcmp.lt.s32.totalorder %v274, 128
    %vm279 = vmand %vm275, %vm277
    %vm280 = vmand %vm276, %vm278
    %v281 = vsel %vm279, %v271, 0.0
    %v282 = vsel %vm280, %v272, 0.0
    %283 = vst [vmem:[#allocation2 + $0x40] sm:$0xf] %v281
    %284 = vst [vmem:[#allocation2 + $0x48] sm:$0xf] %v282
    %v285 = vld [vmem:[%s1] sm:$0xff]
    %v286 = vld [vmem:[#allocation2] sm:$0xff]
    %v287 = vld [vmem:[#allocation2 + $0x8] sm:$0xff]
    %v288 = vld [vmem:[#allocation2 + $0x10] sm:$0xff]
    %v289 = vld [vmem:[#allocation2 + $0x18] sm:$0xff]
    %v290 = vld [vmem:[#allocation2 + $0x20] sm:$0xff]
    %v291 = vld [vmem:[#allocation2 + $0x28] sm:$0xff]
    %v292 = vld [vmem:[#allocation2 + $0x30] sm:$0xff]
    %v293 = vld [vmem:[#allocation2 + $0x38] sm:$0xff]
    %v294 = vld [vmem:[#allocation2 + $0x40] sm:$0xf]
    %v295 = vld [vmem:[#allocation2 + $0x48] sm:$0xf]
    %vm296 = vcmask 293888
    %v298 = vsel %vm296, %v285, 0
    %vm300 = vcmask 1043456
    %v302 = vsel %vm300, %v294, 0
    %v305 = vsel %vm300, %v295, 0
    %307 = vmatpush.msra.mxu0 0.0
    %308 = vmatpush.msra.mxu0 0.0
    %309 = vmatpush.msra.mxu0 0.0
    %310 = vmatpush.msra.mxu0 0.0
    %311 = vmatpush.msra.mxu0 0.0
    %312 = vmatpush.msra.mxu0 0.0
    %313 = vmatpush.msra.mxu0 0.0
    %314 = vmatpush.msra.mxu0 0.0
    %315 = vmatpush.msra.mxu0 0.0
    %316 = vmatpush.msra.mxu0 0.0
    %317 = vmatpush.msra.mxu0 0.0
    %318 = vmatpush.msra.mxu0 %v302
    %319 = vmatpush.msra.mxu0 %v292
    %320 = vmatpush.msra.mxu0 %v290
    %321 = vmatpush.msra.mxu0 %v288
    %322 = vmatpush.msra.mxu0 %v286
    %323 = vmatmul.f32.gmra.mxu0 %v298
    %v324 = vpop.f32.mrf.mxu0
    %v325 = vadd.f32 0.0, %v324
    %326 = vdwg.mxu0
    %327 = vmatpush.msra.mxu0 0.0
    %328 = vmatpush.msra.mxu0 0.0
    %329 = vmatpush.msra.mxu0 0.0
    %330 = vmatpush.msra.mxu0 0.0
    %331 = vmatpush.msra.mxu0 0.0
    %332 = vmatpush.msra.mxu0 0.0
    %333 = vmatpush.msra.mxu0 0.0
    %334 = vmatpush.msra.mxu0 0.0
    %335 = vmatpush.msra.mxu0 0.0
    %336 = vmatpush.msra.mxu0 0.0
    %337 = vmatpush.msra.mxu0 0.0
    %338 = vmatpush.msra.mxu0 %v305
    %339 = vmatpush.msra.mxu0 %v293
    %340 = vmatpush.msra.mxu0 %v291
    %341 = vmatpush.msra.mxu0 %v289
    %342 = vmatpush.msra.mxu0 %v287
    %343 = vmatmul.f32.gmra.mxu0 %v298
    %v344 = vpop.f32.mrf.mxu0
    %v345 = vadd.f32 0.0, %v344
    %346 = vdwg.mxu0
    %v347 = vld [vmem:[%s2] sm:$0xff]
    %v348 = vld [vmem:[%s3] sm:$0xff]
    %v349 = vadd.f32 %v325, %v345
    %350 = vadd.xlane.f32.xlu0 %v349
    %v351 = vpop.xlane.xlu0 %350
    %v352 = vmul.f32 %v325, %v325
    %v353 = vmul.f32 %v345, %v345
    %v354 = vadd.f32 %v352, %v353
    %355 = vadd.xlane.f32.xlu0 %v354
    %v356 = vpop.xlane.xlu0 %355
    %v357 = vmul.f32 %v351, 0.00390625
    %v358 = vmul.f32 %v356, 0.00390625
    %v359 = vmul.f32 %v357, %v357
    %v360 = vsub.f32 %v358, %v359
    %v361 = vadd.f32 %v360, 1e-05
    %v362 = vrsqrt.pop %v361
    %v363 = vmul.f32 %v362, %v361
    %v364 = vmul.f32 %v363, %v362
    %v365 = vmul.f32 0.5, %v364
    %v366 = vsub.f32 1.5, %v365
    %v367 = vmul.f32 %v362, %v366
    %vm368 = vweird.f32 %v361
    %vm369 = vweird.f32 %v362
    %vm370 = vmor %vm368, %vm369
    %v371 = vsel %vm370, %v362, %v367
    %v372 = vmul.f32 %v347, %v371
    %v373 = vmul.f32 %v357, %v372
    %v374 = vsub.f32 %v348, %v373
    %376 = vset.pattern.permute.xlu0 0
    %377 = vperm.xlu0 %376, %v372
    %v378 = vpop.permute.xlu0 %377
    %v380 = vmul.f32 %v325, %v378
    %v381 = vmul.f32 %v345, %v378
    %383 = vset.pattern.permute.xlu0 0
    %384 = vperm.xlu0 %383, %v374
    %v385 = vpop.permute.xlu0 %384
    %v387 = vadd.f32 %v380, %v385
    %v388 = vadd.f32 %v381, %v385
    %v389 = vmax.f32 %v387, 0.0
    %v390 = vmax.f32 %v388, 0.0
    %391 = vrot.lane.b32.xlu0 %v389, 4
    %v392 = vpop.permute.xlu0 %391
    %393 = vrot.lane.b32.xlu0 %v390, 4
    %v394 = vpop.permute.xlu0 %393
    %v395 = vsel %vm71, %v392, %v394
    %v396 = vsel %vm71, %v394, %v392
    %v397 = vsel %vm80, %v396, 0.0
    %v398 = vsel %vm81, %v395, 0.0
    %399 = vst [vmem:[#allocation2] sm:$0xff] %v397
    %400 = vst [vmem:[#allocation2 + $0x8] sm:$0xff] %v398
    %401 = vrot.lane.b32.xlu0 %v389, 3
    %v402 = vpop.permute.xlu0 %401
    %403 = vrot.lane.b32.xlu0 %v390, 3
    %v404 = vpop.permute.xlu0 %403
    %v405 = vsel %vm95, %v402, %v404
    %v406 = vsel %vm95, %v404, %v402
    %v407 = vsel %vm104, %v406, 0.0
    %v408 = vsel %vm105, %v405, 0.0
    %409 = vst [vmem:[#allocation2 + $0x10] sm:$0xff] %v407
    %410 = vst [vmem:[#allocation2 + $0x18] sm:$0xff] %v408
    %411 = vrot.lane.b32.xlu0 %v389, 2
    %v412 = vpop.permute.xlu0 %411
    %413 = vrot.lane.b32.xlu0 %v390, 2
    %v414 = vpop.permute.xlu0 %413
    %v415 = vsel %vm125, %v412, %v414
    %v416 = vsel %vm125, %v414, %v412
    %v417 = vsel %vm134, %v416, 0.0
    %v418 = vsel %vm135, %v415, 0.0
    %419 = vst [vmem:[#allocation2 + $0x20] sm:$0xff] %v417
    %420 = vst [vmem:[#allocation2 + $0x28] sm:$0xff] %v418
    %421 = vrot.lane.b32.xlu0 %v389, 1
    %v422 = vpop.permute.xlu0 %421
    %423 = vrot.lane.b32.xlu0 %v390, 1
    %v424 = vpop.permute.xlu0 %423
    %v425 = vsel %vm149, %v422, %v424
    %v426 = vsel %vm149, %v424, %v422
    %v427 = vsel %vm158, %v426, 0.0
    %v428 = vsel %vm159, %v425, 0.0
    %429 = vst [vmem:[#allocation2 + $0x30] sm:$0xff] %v427
    %430 = vst [vmem:[#allocation2 + $0x38] sm:$0xff] %v428
    %431 = vst [vmem:[#allocation2 + $0x40] sm:$0xff] %v389
    %432 = vst [vmem:[#allocation2 + $0x48] sm:$0xff] %v390
    %433 = vrot.lane.b32.xlu0 %v389, 127
    %v434 = vpop.permute.xlu0 %433
    %435 = vrot.lane.b32.xlu0 %v390, 127
    %v436 = vpop.permute.xlu0 %435
    %v437 = vsel %vm186, %v434, %v436
    %v438 = vsel %vm186, %v436, %v434
    %v439 = vsel %vm195, %v437, 0.0
    %v440 = vsel %vm196, %v438, 0.0
    %441 = vst [vmem:[#allocation2 + $0x50] sm:$0xff] %v439
    %442 = vst [vmem:[#allocation2 + $0x58] sm:$0xff] %v440
    %443 = vrot.lane.b32.xlu0 %v389, 126
    %v444 = vpop.permute.xlu0 %443
    %445 = vrot.lane.b32.xlu0 %v390, 126
    %v446 = vpop.permute.xlu0 %445
    %v447 = vsel %vm216, %v444, %v446
    %v448 = vsel %vm216, %v446, %v444
    %v449 = vsel %vm225, %v447, 0.0
    %v450 = vsel %vm226, %v448, 0.0
    %451 = vst [vmem:[#allocation2 + $0x60] sm:$0xff] %v449
    %452 = vst [vmem:[#allocation2 + $0x68] sm:$0xff] %v450
    %453 = vrot.lane.b32.xlu0 %v389, 125
    %v454 = vpop.permute.xlu0 %453
    %455 = vrot.lane.b32.xlu0 %v390, 125
    %v456 = vpop.permute.xlu0 %455
    %v457 = vsel %vm240, %v454, %v456
    %v458 = vsel %vm240, %v456, %v454
    %v459 = vsel %vm249, %v457, 0.0
    %v460 = vsel %vm250, %v458, 0.0
    %461 = vst [vmem:[#allocation2 + $0x70] sm:$0xff] %v459
    %462 = vst [vmem:[#allocation2 + $0x78] sm:$0xff] %v460
    %463 = vrot.lane.b32.xlu0 %v389, 124
    %v464 = vpop.permute.xlu0 %463
    %465 = vrot.lane.b32.xlu0 %v390, 124
    %v466 = vpop.permute.xlu0 %465
    %v467 = vsel %vm270, %v464, %v466
    %v468 = vsel %vm270, %v466, %v464
    %v469 = vsel %vm279, %v467, 0.0
    %v470 = vsel %vm280, %v468, 0.0
    %471 = vst [vmem:[#allocation2 + $0x80] sm:$0xff] %v469
    %472 = vst [vmem:[#allocation2 + $0x88] sm:$0xff] %v470
    %v473 = vld [vmem:[%s4] sm:$0xff]
    %v474 = vld [vmem:[#allocation2] sm:$0xff]
    %v475 = vld [vmem:[#allocation2 + $0x8] sm:$0xff]
    %v476 = vld [vmem:[#allocation2 + $0x10] sm:$0xff]
    %v477 = vld [vmem:[#allocation2 + $0x18] sm:$0xff]
    %v478 = vld [vmem:[#allocation2 + $0x20] sm:$0xff]
    %v479 = vld [vmem:[#allocation2 + $0x28] sm:$0xff]
    %v480 = vld [vmem:[#allocation2 + $0x30] sm:$0xff]
    %v481 = vld [vmem:[#allocation2 + $0x38] sm:$0xff]
    %v482 = vld [vmem:[#allocation2 + $0x40] sm:$0xff]
    %v483 = vld [vmem:[#allocation2 + $0x48] sm:$0xff]
    %v484 = vld [vmem:[#allocation2 + $0x50] sm:$0xff]
    %v485 = vld [vmem:[#allocation2 + $0x58] sm:$0xff]
    %v486 = vld [vmem:[#allocation2 + $0x60] sm:$0xff]
    %v487 = vld [vmem:[#allocation2 + $0x68] sm:$0xff]
    %v488 = vld [vmem:[#allocation2 + $0x70] sm:$0xff]
    %v489 = vld [vmem:[#allocation2 + $0x78] sm:$0xff]
    %v490 = vld [vmem:[#allocation2 + $0x80] sm:$0xff]
    %v491 = vld [vmem:[#allocation2 + $0x88] sm:$0xff]
    %vm492 = vcmask 588800
    %v494 = vsel %vm492, %v473, 0
    %496 = vmatpush.msra.mxu0 0.0
    %497 = vmatpush.msra.mxu0 0.0
    %498 = vmatpush.msra.mxu0 0.0
    %499 = vmatpush.msra.mxu0 0.0
    %500 = vmatpush.msra.mxu0 0.0
    %501 = vmatpush.msra.mxu0 0.0
    %502 = vmatpush.msra.mxu0 0.0
    %503 = vmatpush.msra.mxu0 %v490
    %504 = vmatpush.msra.mxu0 %v488
    %505 = vmatpush.msra.mxu0 %v486
    %506 = vmatpush.msra.mxu0 %v484
    %507 = vmatpush.msra.mxu0 %v482
    %508 = vmatpush.msra.mxu0 %v480
    %509 = vmatpush.msra.mxu0 %v478
    %510 = vmatpush.msra.mxu0 %v476
    %511 = vmatpush.msra.mxu0 %v474
    %512 = vmatmul.f32.gmra.mxu0 %v494
    %v513 = vpop.f32.mrf.mxu0
    %v514 = vadd.f32 0.0, %v513
    %515 = vdwg.mxu0
    %516 = vmatpush.msra.mxu0 0.0
    %517 = vmatpush.msra.mxu0 0.0
    %518 = vmatpush.msra.mxu0 0.0
    %519 = vmatpush.msra.mxu0 0.0
    %520 = vmatpush.msra.mxu0 0.0
    %521 = vmatpush.msra.mxu0 0.0
    %522 = vmatpush.msra.mxu0 0.0
    %523 = vmatpush.msra.mxu0 %v491
    %524 = vmatpush.msra.mxu0 %v489
    %525 = vmatpush.msra.mxu0 %v487
    %526 = vmatpush.msra.mxu0 %v485
    %527 = vmatpush.msra.mxu0 %v483
    %528 = vmatpush.msra.mxu0 %v481
    %529 = vmatpush.msra.mxu0 %v479
    %530 = vmatpush.msra.mxu0 %v477
    %531 = vmatpush.msra.mxu0 %v475
    %532 = vmatmul.f32.gmra.mxu0 %v494
    %v533 = vpop.f32.mrf.mxu0
    %v534 = vadd.f32 0.0, %v533
    %535 = vdwg.mxu0
    %v536 = vld [vmem:[%s5] sm:$0xff]
    %v537 = vld [vmem:[%s6] sm:$0xff]
    %v538 = vadd.f32 %v514, %v534
    %539 = vadd.xlane.f32.xlu0 %v538
    %v540 = vpop.xlane.xlu0 %539
    %v541 = vmul.f32 %v514, %v514
    %v542 = vmul.f32 %v534, %v534
    %v543 = vadd.f32 %v541, %v542
    %544 = vadd.xlane.f32.xlu0 %v543
    %v545 = vpop.xlane.xlu0 %544
    %v546 = vmul.f32 %v540, 0.00390625
    %v547 = vmul.f32 %v545, 0.00390625
    %v548 = vmul.f32 %v546, %v546
    %v549 = vsub.f32 %v547, %v548
    %v550 = vadd.f32 %v549, 1e-05
    %v551 = vrsqrt.pop %v550
    %v552 = vmul.f32 %v551, %v550
    %v553 = vmul.f32 %v552, %v551
    %v554 = vmul.f32 0.5, %v553
    %v555 = vsub.f32 1.5, %v554
    %v556 = vmul.f32 %v551, %v555
    %vm557 = vweird.f32 %v550
    %vm558 = vweird.f32 %v551
    %vm559 = vmor %vm557, %vm558
    %v560 = vsel %vm559, %v551, %v556
    %v561 = vmul.f32 %v536, %v560
    %v562 = vmul.f32 %v546, %v561
    %v563 = vsub.f32 %v537, %v562
    %v564 = vld [vmem:[%s7] sm:$0xff]
    %565 = vst [vmem:[#allocation1] ss:$2 sm:$0xff] %v33
    %v566 = vld.sshfl [vmem:[#allocation1] sm:$0xff pattern:$0x75316420]
    %v567 = vld.sshfl [vmem:[#allocation1 + $0x8] sm:$0xff pattern:$0x75316420]
    %vm568 = vcmask 31744
    %v570 = vsel %vm568, %v564, 0
    %v572 = vsel %vm300, %v566, 0
    %v574 = vsel %vm300, %v567, 0
    %576 = vmatpush.msra.mxu0 0.0
    %577 = vmatpush.msra.mxu0 0.0
    %578 = vmatpush.msra.mxu0 0.0
    %579 = vmatpush.msra.mxu0 0.0
    %580 = vmatpush.msra.mxu0 0.0
    %581 = vmatpush.msra.mxu0 0.0
    %582 = vmatpush.msra.mxu0 0.0
    %583 = vmatpush.msra.mxu0 0.0
    %584 = vmatpush.msra.mxu0 0.0
    %585 = vmatpush.msra.mxu0 0.0
    %586 = vmatpush.msra.mxu0 0.0
    %587 = vmatpush.msra.mxu0 0.0
    %588 = vmatpush.msra.mxu0 0.0
    %589 = vmatpush.msra.mxu0 0.0
    %590 = vmatpush.msra.mxu0 0.0
    %591 = vmatpush.msra.mxu0 %v572
    %592 = vmatmul.f32.gmra.mxu0 %v570
    %v593 = vpop.f32.mrf.mxu0
    %v594 = vadd.f32 0.0, %v593
    %595 = vdwg.mxu0
    %596 = vmatpush.msra.mxu0 0.0
    %597 = vmatpush.msra.mxu0 0.0
    %598 = vmatpush.msra.mxu0 0.0
    %599 = vmatpush.msra.mxu0 0.0
    %600 = vmatpush.msra.mxu0 0.0
    %601 = vmatpush.msra.mxu0 0.0
    %602 = vmatpush.msra.mxu0 0.0
    %603 = vmatpush.msra.mxu0 0.0
    %604 = vmatpush.msra.mxu0 0.0
    %605 = vmatpush.msra.mxu0 0.0
    %606 = vmatpush.msra.mxu0 0.0
    %607 = vmatpush.msra.mxu0 0.0
    %608 = vmatpush.msra.mxu0 0.0
    %609 = vmatpush.msra.mxu0 0.0
    %610 = vmatpush.msra.mxu0 0.0
    %611 = vmatpush.msra.mxu0 %v574
    %612 = vmatmul.f32.gmra.mxu0 %v570
    %v613 = vpop.f32.mrf.mxu0
    %v614 = vadd.f32 0.0, %v613
    %615 = vdwg.mxu0
    %617 = vset.pattern.permute.xlu0 0
    %618 = vperm.xlu0 %617, %v561
    %v619 = vpop.permute.xlu0 %618
    %v621 = vmul.f32 %v514, %v619
    %v622 = vmul.f32 %v534, %v619
    %624 = vset.pattern.permute.xlu0 0
    %625 = vperm.xlu0 %624, %v563
    %v626 = vpop.permute.xlu0 %625
    %v628 = vadd.f32 %v621, %v626
    %v629 = vadd.f32 %v622, %v626
    %v630 = vmax.f32 %v628, 0.0
    %v631 = vmax.f32 %v629, 0.0
    %v632 = vadd.f32 %v630, %v594
    %v633 = vadd.f32 %v631, %v614
    %v634 = vld [vmem:[%s8] sm:$0xff]
    %636 = vset.pattern.permute.xlu0 0
    %637 = vperm.xlu0 %636, %v634
    %v638 = vpop.permute.xlu0 %637
    %v640 = vadd.f32 %v632, %v638
    %v641 = vadd.f32 %v633, %v638
    %642 = vst [vmem:[#allocation3] sm:$0xff] %v640
    %643 = vst [vmem:[#allocation3 + $0x8] sm:$0xff] %v641
    // Predicated region
    $region38: #{tpu_custom_call.1} parent=1 // pred_check
      _
    $region39: #{tpu_custom_call.1} parent=1 // pred_check_branch
      %645 = sbr.rel (0) target = $region41
    $region40: #{tpu_custom_call.1} parent=1 // pred_region
      %647 = vsyncadd [#allocation4], 0
      %s649 = sshll.u32 [#allocation3], 4
      %s650 = int_to_ptr.vmem [resolvable:$true] %s649
      %s651 = sshll.u32 %s9, 4
      %s652 = int_to_ptr.hbm [resolvable:$true] %s651
      %654 = dma.vmem_to_hbm [thread:$0]  %s650, 256, %s652, [#allocation4]
    $region41: #{tpu_custom_call.1} parent=1 // pred_fallthru
      _
    // Predicated region
    $region42: #{tpu_custom_call.1} parent=1 // pred_check
      _
    $region43: #{tpu_custom_call.1} parent=1 // pred_check_branch
      %656 = sbr.rel (0) target = $region45
    $region44: #{tpu_custom_call.1} parent=1 // pred_region
      %658 = dma.done [#allocation4], 256
    $region45: #{tpu_custom_call.1} parent=1 // pred_fallthru
      _
    %659 = vsyncpa [#allocation4], 1

</llo_original>
